<compile_context>
chip_gen: v7x
topology: tpu7x:2x2x1
jax: 0.10.0
libtpu: 0.0.40
codegen_flags: <defaults>
</compile_context>

<pallas_src>
import numpy as np
import jax
import jax.numpy as jnp
from jax.experimental import pallas as pl
from jax.experimental.pallas import tpu as pltpu

EXPANSION = 4
BN_EPS = 1e-5


# ----------------------------------------------------------------------------
# Parameter initialization (deterministic, mirrors the PyTorch module shapes)
# ----------------------------------------------------------------------------
def init_params(key, in_C, out_C, groups):
    C = out_C // EXPANSION
    ks = jax.random.split(key, 6)

    def u(k, shape, scale=0.5):
        return (jax.random.uniform(k, shape, jnp.float32) - 0.5) * 2.0 * scale

    p = {}
    p['w1'] = u(ks[0], (C, in_C // groups, 1, 1))      # Conv2d(in_C, C, 1, groups=g)
    p['w2'] = u(ks[1], (C, 1, 3, 3))                    # Conv2d(C, C, 3, groups=C)
    p['w3'] = u(ks[2], (out_C, C // groups, 1, 1))      # Conv2d(C, out_C, 1, groups=g)
    for i, (name, ch) in enumerate([('bn1', C), ('bn2', C), ('bn3', out_C)]):
        kg, kb, km, kv = jax.random.split(ks[3 + i], 4)
        p[name] = dict(
            gamma=1.0 + 0.1 * u(kg, (ch,)),
            beta=0.1 * u(kb, (ch,)),
            mean=0.1 * u(km, (ch,)),
            var=jax.random.uniform(kv, (ch,), jnp.float32, 0.5, 1.5),
        )
    return p


# ----------------------------------------------------------------------------
# Pack params: fold BN scales into weights, densify grouped convs, fold shuffle
# ----------------------------------------------------------------------------
def pack_params(p, in_C, out_C, groups, H, W, stride):
    g = groups
    C = out_C // EXPANSION
    n = C // g
    S = H * W

    def fold(bn):
        s = np.asarray(bn['gamma']) / np.sqrt(np.asarray(bn['var']) + BN_EPS)
        b = np.asarray(bn['beta']) - np.asarray(bn['mean']) * s
        return s.astype(np.float32), b.astype(np.float32)

    s1, b1 = fold(p['bn1'])
    s2, b2 = fold(p['bn2'])
    s3, b3 = fold(p['bn3'])

    w1 = np.asarray(p['w1'])[:, :, 0, 0]   # [C, in_C//g]
    w2 = np.asarray(p['w2'])[:, 0]         # [C, 3, 3]
    w3 = np.asarray(p['w3'])[:, :, 0, 0]   # [out_C, C//g]

    # shuffle maps: shuffled[c] = h1[src(c)];  dst(i) = position channel i moves to
    src = np.array([(c % g) * n + (c // g) for c in range(C)])
    dst = np.array([(i % n) * g + (i // n) for i in range(C)])

    # conv1 (grouped 1x1) -> dense block-diagonal [C, in_C], bn1 scale folded
    in_cg = in_C // g
    W1t = np.zeros((C, in_C), np.float32)
    for oc in range(C):
        go = oc // (C // g)
        W1t[oc, go * in_cg:(go + 1) * in_cg] = w1[oc] * s1[oc]

    # depthwise taps + bn2 permuted into conv1-output channel order (shuffle folded),
    # bn2 scale folded into the taps
    W2n = np.zeros((C, 9), np.float32)
    b2n = np.zeros((C,), np.float32)
    for i in range(C):
        c = int(dst[i])
        W2n[i] = w2[c].reshape(9) * s2[c]
        b2n[i] = b2[c]

    # conv3 (grouped 1x1) -> dense [out_C, C] over the pre-shuffle channel index,
    # bn3 scale folded
    out_cg3 = out_C // g
    in_cg3 = C // g
    W3t = np.zeros((out_C, C), np.float32)
    for o in range(out_C):
        go = o // out_cg3
        for k in range(in_cg3):
            i = int(src[go * in_cg3 + k])
            W3t[o, i] = w3[o, k] * s3[o]

    # lane masks killing the x-wraparound of the flat lane shifts
    xl = np.ones((H, W), np.float32); xl[:, 0] = 0.0       # invalid reading x-1
    xr = np.ones((H, W), np.float32); xr[:, W - 1] = 0.0   # invalid reading x+1

    col = lambda v: jnp.asarray(v, jnp.float32).reshape(-1, 1)
    packed = dict(
        W1=jnp.asarray(W1t), b1=col(b1),
        W2=jnp.asarray(W2n), b2=col(b2n),
        W3=jnp.asarray(W3t), b3=col(b3),
        xml=jnp.asarray(xl.reshape(1, S)),
        xmr=jnp.asarray(xr.reshape(1, S)),
    )

    if stride > 1:
        Ho = (H - 1) // stride + 1
        Wo = (W - 1) // stride + 1
        So = Ho * Wo
        Dsel = np.zeros((S, So), np.float32)   # strided subsample selection (0/1)
        Pool = np.zeros((S, So), np.float32)   # 3x3/stride avg pool (pad counted, /9)
        for yo in range(Ho):
            for xo in range(Wo):
                po = yo * Wo + xo
                yc, xc = yo * stride, xo * stride
                Dsel[yc * W + xc, po] = 1.0
                for dy in (-1, 0, 1):
                    for dx in (-1, 0, 1):
                        yy, xx = yc + dy, xc + dx
                        if 0 <= yy < H and 0 <= xx < W:
                            Pool[yy * W + xx, po] += 1.0 / 9.0
        packed['Dsel'] = jnp.asarray(Dsel)
        packed['Pool'] = jnp.asarray(Pool)
    return packed


# ----------------------------------------------------------------------------
# Pallas kernel
# ----------------------------------------------------------------------------
def make_kernel(H, W, in_C, out_C, C, stride):
    S = H * W
    Ho = (H - 1) // stride + 1
    Wo = (W - 1) // stride + 1

    def lane_shift(v, k):
        # out[:, p] = v[:, p + k], zero filled where p + k is out of range
        if k == 0:
            return v
        z = jnp.zeros((v.shape[0], abs(k)), v.dtype)
        if k > 0:
            return jnp.concatenate([v[:, k:], z], axis=1)
        return jnp.concatenate([z, v[:, :v.shape[1] + k]], axis=1)

    def depthwise3x3(h1, w2_ref, xml_ref, xmr_ref):
        # h1: [C, S] with flat spatial on lanes; 3x3 conv, pad=1, bn2 scale folded.
        xml = xml_ref[...]     # [1, S] zero where reading x-1 leaves the row
        xmr = xmr_ref[...]     # [1, S] zero where reading x+1 leaves the row
        hx = (lane_shift(h1, -1) * xml,    # reads (y, x-1)
              h1,                           # reads (y, x)
              lane_shift(h1, 1) * xmr)      # reads (y, x+1)
        acc = jnp.zeros((C, S), jnp.float32)
        for dy in range(3):
            k = (dy - 1) * W                # row shift; zero fill == y padding
            for dx in range(3):
                t = dy * 3 + dx
                acc = acc + lane_shift(hx[dx], k) * w2_ref[:, t:t + 1]
        return acc

    if stride == 1:
        out_channels = out_C
        param_keys = ('W1', 'b1', 'W2', 'b2', 'W3', 'b3', 'xml', 'xmr')

        def kernel(x_ref, w1_ref, b1_ref, w2_ref, b2_ref, w3_ref, b3_ref,
                   xml_ref, xmr_ref, o_ref):
            x = x_ref[0].astype(jnp.float32)                         # [in_C, S]
            # conv1 (grouped 1x1 as dense matmul, bn1 scale folded) + bias + relu
            h1 = jnp.dot(w1_ref[...], x, preferred_element_type=jnp.float32)
            h1 = jnp.maximum(h1 + b1_ref[...], 0.0)                  # [C, S]
            # 3x3 depthwise (shuffle + bn2 scale folded) + bias + relu
            acc = depthwise3x3(h1, w2_ref, xml_ref, xmr_ref)
            h2 = jnp.maximum(acc + b2_ref[...], 0.0)
            # conv3 (grouped 1x1 as dense matmul, bn3 scale folded) + bias
            h3 = jnp.dot(w3_ref[...], h2, preferred_element_type=jnp.float32)
            out = jnp.maximum(h3 + b3_ref[...] + x, 0.0)             # residual + relu
            o_ref[0] = out.astype(o_ref.dtype)

    else:
        out_channels = out_C + in_C
        param_keys = ('W1', 'b1', 'W2', 'b2', 'W3', 'b3', 'xml', 'xmr',
                      'Dsel', 'Pool')

        def kernel(x_ref, w1_ref, b1_ref, w2_ref, b2_ref, w3_ref, b3_ref,
                   xml_ref, xmr_ref, dsel_ref, pool_ref, o_ref):
            x = x_ref[0].astype(jnp.float32)                         # [in_C, S]
            h1 = jnp.dot(w1_ref[...], x, preferred_element_type=jnp.float32)
            h1 = jnp.maximum(h1 + b1_ref[...], 0.0)                  # [C, S]
            acc = depthwise3x3(h1, w2_ref, xml_ref, xmr_ref)         # full-res
            # strided subsample of the depthwise output (exact 0/1 matmul)
            d = jnp.dot(acc, dsel_ref[...], preferred_element_type=jnp.float32)
            h2 = jnp.maximum(d + b2_ref[...], 0.0)                   # [C, So]
            h3 = jnp.dot(w3_ref[...], h2, preferred_element_type=jnp.float32)
            h3 = h3 + b3_ref[...]                                    # [out_C, So]
            # 3x3 avg-pool shortcut (count_include_pad) as a matmul
            pooled = jnp.dot(x, pool_ref[...], preferred_element_type=jnp.float32)
            o_ref[0, 0:out_C, :] = jnp.maximum(h3, 0.0).astype(o_ref.dtype)
            o_ref[0, out_C:out_C + in_C, :] = jnp.maximum(pooled, 0.0).astype(o_ref.dtype)

    return kernel, param_keys, out_channels, Ho, Wo


def bottleneck_forward(x_nchw, packed, *, in_C, out_C, groups, stride):
    B, _, H, W = x_nchw.shape
    C = out_C // EXPANSION
    S = H * W
    if stride == 1:
        assert in_C == out_C, "residual add requires in_C == out_C"

    kernel, param_keys, out_channels, Ho, Wo = make_kernel(H, W, in_C, out_C, C, stride)
    So = Ho * Wo

    # NCHW stays channel-major: just flatten the spatial dims onto the lane axis.
    x = x_nchw.reshape(B, in_C, S).astype(jnp.float32)

    def full_spec(arr):
        nd = arr.ndim
        return pl.BlockSpec(arr.shape, lambda b, _nd=nd: (0,) * _nd)

    in_specs = [pl.BlockSpec((1, in_C, S), lambda b: (b, 0, 0))]
    in_specs += [full_spec(packed[k]) for k in param_keys]
    out_spec = pl.BlockSpec((1, out_channels, So), lambda b: (b, 0, 0))

    out = pl.pallas_call(
        kernel,
        out_shape=jax.ShapeDtypeStruct((B, out_channels, So), jnp.float32),
        grid_spec=pltpu.PrefetchScalarGridSpec(
            num_scalar_prefetch=0,
            grid=(B,),
            in_specs=in_specs,
            out_specs=out_spec),
        compiler_params=pltpu.CompilerParams(
            dimension_semantics=("parallel",)),
    )(x, *(packed[k] for k in param_keys))

    # [B, out_channels, Ho*Wo] -> NCHW
    return out.reshape(B, out_channels, Ho, Wo)


# ----------------------------------------------------------------------------
# Pure-JAX reference mirroring the PyTorch forward (NCHW, eval-mode BN)
# ----------------------------------------------------------------------------
def bottleneck_ref(x, p, *, in_C, out_C, groups, stride):
    B, _, H, W = x.shape
    g = groups
    C = out_C // EXPANSION

    def bn(h, bnp):
        s = bnp['gamma'] / jnp.sqrt(bnp['var'] + BN_EPS)
        b = bnp['beta'] - bnp['mean'] * s
        return h * s[None, :, None, None] + b[None, :, None, None]

    # conv1 (grouped 1x1)
    xg = x.reshape(B, g, in_C // g, H, W)
    w1g = p['w1'][:, :, 0, 0].reshape(g, C // g, in_C // g)
    h = jnp.einsum('bgihw,goi->bgohw', xg, w1g,
                   precision=jax.lax.Precision.HIGHEST).reshape(B, C, H, W)
    h = jax.nn.relu(bn(h, p['bn1']))
    # channel shuffle
    h = h.reshape(B, g, C // g, H, W).transpose(0, 2, 1, 3, 4).reshape(B, C, H, W)
    # conv2 (3x3 depthwise, stride, pad=1)
    Ho = (H - 1) // stride + 1
    Wo = (W - 1) // stride + 1
    hp = jnp.pad(h, ((0, 0), (0, 0), (1, 1), (1, 1)))
    acc = jnp.zeros((B, C, Ho, Wo), jnp.float32)
    for dy in range(3):
        for dx in range(3):
            sl = hp[:, :, dy:dy + (Ho - 1) * stride + 1:stride,
                    dx:dx + (Wo - 1) * stride + 1:stride]
            acc = acc + sl * p['w2'][:, 0, dy, dx][None, :, None, None]
    h = jax.nn.relu(bn(acc, p['bn2']))
    # conv3 (grouped 1x1)
    hg = h.reshape(B, g, C // g, Ho, Wo)
    w3g = p['w3'][:, :, 0, 0].reshape(g, out_C // g, C // g)
    h = jnp.einsum('bgihw,goi->bgohw', hg, w3g,
                   precision=jax.lax.Precision.HIGHEST).reshape(B, out_C, Ho, Wo)
    h = bn(h, p['bn3'])
    if stride > 1:
        xp = jnp.pad(x, ((0, 0), (0, 0), (1, 1), (1, 1)))
        pooled = jnp.zeros((B, in_C, Ho, Wo), jnp.float32)
        for dy in range(3):
            for dx in range(3):
                pooled = pooled + xp[:, :, dy:dy + (Ho - 1) * stride + 1:stride,
                                     dx:dx + (Wo - 1) * stride + 1:stride]
        pooled = pooled / 9.0
        h = jnp.concatenate([h, pooled], axis=1)
    else:
        h = h + x
    return jax.nn.relu(h)


if __name__ == "__main__":
    configs = [
        dict(B=2, in_C=32, out_C=32, groups=4, stride=1, H=16, W=16),
        dict(B=2, in_C=32, out_C=64, groups=4, stride=2, H=16, W=16),
    ]
    key = jax.random.PRNGKey(0)
    for cfg in configs:
        key, kx, kp = jax.random.split(key, 3)
        x_nchw = jax.random.normal(
            kx, (cfg['B'], cfg['in_C'], cfg['H'], cfg['W']), jnp.float32)

        params = init_params(kp, cfg['in_C'], cfg['out_C'], cfg['groups'])
        packed = pack_params(params, cfg['in_C'], cfg['out_C'], cfg['groups'],
                             cfg['H'], cfg['W'], cfg['stride'])

        out = bottleneck_forward(x_nchw, packed, in_C=cfg['in_C'],
                                 out_C=cfg['out_C'], groups=cfg['groups'],
                                 stride=cfg['stride'])
        out = jax.block_until_ready(out)

        ref = bottleneck_ref(x_nchw, params, in_C=cfg['in_C'], out_C=cfg['out_C'],
                             groups=cfg['groups'], stride=cfg['stride'])
        np.testing.assert_allclose(np.asarray(out), np.asarray(ref),
                                   rtol=1e-2, atol=1e-2)
    print("KERNEL_OK")
</pallas_src>

<mosaic_0001>
module attributes {stable_mosaic.version = 11 : i64} {
  func.func @kernel(%arg0: i32, %arg1: memref<1x32x256xf32, #tpu.memory_space<vmem>>, %arg2: memref<8x32xf32, #tpu.memory_space<vmem>>, %arg3: memref<8x1xf32, #tpu.memory_space<vmem>>, %arg4: memref<8x9xf32, #tpu.memory_space<vmem>>, %arg5: memref<8x1xf32, #tpu.memory_space<vmem>>, %arg6: memref<32x8xf32, #tpu.memory_space<vmem>>, %arg7: memref<32x1xf32, #tpu.memory_space<vmem>>, %arg8: memref<1x256xf32, #tpu.memory_space<vmem>>, %arg9: memref<1x256xf32, #tpu.memory_space<vmem>>, %arg10: memref<1x32x256xf32, #tpu.memory_space<vmem>>) attributes {dimension_semantics = [#tpu.dimension_semantics<parallel>], iteration_bounds = array<i64: 2>, scalar_prefetch = 0 : i64, scratch_operands = 0 : i64, tpu.core_type = #tpu.core_type<tc>, window_params = [{transform_indices = @transform_0, window_bounds = array<i64: 1, 32, 256>}, {pipeline_mode = #tpu.pipeline_mode<synchronous>, transform_indices = @transform_1, window_bounds = array<i64: 8, 32>}, {pipeline_mode = #tpu.pipeline_mode<synchronous>, transform_indices = @transform_2, window_bounds = array<i64: 8, 1>}, {pipeline_mode = #tpu.pipeline_mode<synchronous>, transform_indices = @transform_3, window_bounds = array<i64: 8, 9>}, {pipeline_mode = #tpu.pipeline_mode<synchronous>, transform_indices = @transform_4, window_bounds = array<i64: 8, 1>}, {pipeline_mode = #tpu.pipeline_mode<synchronous>, transform_indices = @transform_5, window_bounds = array<i64: 32, 8>}, {pipeline_mode = #tpu.pipeline_mode<synchronous>, transform_indices = @transform_6, window_bounds = array<i64: 32, 1>}, {pipeline_mode = #tpu.pipeline_mode<synchronous>, transform_indices = @transform_7, window_bounds = array<i64: 1, 256>}, {pipeline_mode = #tpu.pipeline_mode<synchronous>, transform_indices = @transform_8, window_bounds = array<i64: 1, 256>}, {transform_indices = @transform_9, window_bounds = array<i64: 1, 32, 256>}]} {
    %c0 = arith.constant 0 : index
    %c0_0 = arith.constant 0 : index
    %c0_1 = arith.constant 0 : index
    %0 = vector.load %arg1[%c0, %c0_0, %c0_1] : memref<1x32x256xf32, #tpu.memory_space<vmem>>, vector<1x32x256xf32>
    %1 = vector.shape_cast %0 : vector<1x32x256xf32> to vector<32x256xf32>
    %c0_2 = arith.constant 0 : index
    %c0_3 = arith.constant 0 : index
    %2 = vector.load %arg2[%c0_2, %c0_3] : memref<8x32xf32, #tpu.memory_space<vmem>>, vector<8x32xf32>
    %cst = arith.constant dense<0.000000e+00> : vector<8x256xf32>
    %3 = tpu.matmul %2, %1, %cst {dimension_numbers = #tpu.dot_dimension_numbers<[1], [0], [0], [1], [0, 0, 1, 1], [], []>} : vector<8x32xf32>, vector<32x256xf32>, vector<8x256xf32> -> vector<8x256xf32>
    %c0_4 = arith.constant 0 : index
    %c0_5 = arith.constant 0 : index
    %4 = vector.load %arg3[%c0_4, %c0_5] : memref<8x1xf32, #tpu.memory_space<vmem>>, vector<8x1xf32>
    %5 = vector.broadcast %4 : vector<8x1xf32> to vector<8x256xf32>
    %6 = arith.addf %3, %5 : vector<8x256xf32>
    %cst_6 = arith.constant 0.000000e+00 : f32
    %7 = vector.broadcast %cst_6 : f32 to vector<8x256xf32>
    %8 = arith.maximumf %6, %7 : vector<8x256xf32>
    %c0_7 = arith.constant 0 : index
    %c0_8 = arith.constant 0 : index
    %9 = vector.load %arg8[%c0_7, %c0_8] : memref<1x256xf32, #tpu.memory_space<vmem>>, vector<1x256xf32>
    %c0_9 = arith.constant 0 : index
    %c0_10 = arith.constant 0 : index
    %10 = vector.load %arg9[%c0_9, %c0_10] : memref<1x256xf32, #tpu.memory_space<vmem>>, vector<1x256xf32>
    %cst_11 = arith.constant 0.000000e+00 : f32
    %11 = vector.broadcast %cst_11 : f32 to vector<8x1xf32>
    %12 = vector.extract_strided_slice %8 {offsets = [0, 0], sizes = [8, 255], strides = [1, 1]} : vector<8x256xf32> to vector<8x255xf32>
    %13 = tpu.concatenate %11, %12 in 1 : vector<8x1xf32>, vector<8x255xf32> -> vector<8x256xf32>
    %14 = vector.broadcast %9 : vector<1x256xf32> to vector<8x256xf32>
    %15 = arith.mulf %13, %14 : vector<8x256xf32>
    %cst_12 = arith.constant 0.000000e+00 : f32
    %16 = vector.broadcast %cst_12 : f32 to vector<8x1xf32>
    %17 = vector.extract_strided_slice %8 {offsets = [0, 1], sizes = [8, 255], strides = [1, 1]} : vector<8x256xf32> to vector<8x255xf32>
    %18 = tpu.concatenate %17, %16 in 1 : vector<8x255xf32>, vector<8x1xf32> -> vector<8x256xf32>
    %19 = vector.broadcast %10 : vector<1x256xf32> to vector<8x256xf32>
    %20 = arith.mulf %18, %19 : vector<8x256xf32>
    %cst_13 = arith.constant 0.000000e+00 : f32
    %21 = vector.broadcast %cst_13 : f32 to vector<8x256xf32>
    %cst_14 = arith.constant 0.000000e+00 : f32
    %22 = vector.broadcast %cst_14 : f32 to vector<8x16xf32>
    %23 = vector.extract_strided_slice %15 {offsets = [0, 0], sizes = [8, 240], strides = [1, 1]} : vector<8x256xf32> to vector<8x240xf32>
    %24 = tpu.concatenate %22, %23 in 1 : vector<8x16xf32>, vector<8x240xf32> -> vector<8x256xf32>
    %c0_15 = arith.constant 0 : index
    %c0_16 = arith.constant 0 : index
    %25 = vector.load %arg4[%c0_15, %c0_16] : memref<8x9xf32, #tpu.memory_space<vmem>>, vector<8x1xf32>
    %26 = vector.broadcast %25 : vector<8x1xf32> to vector<8x256xf32>
    %27 = arith.mulf %24, %26 : vector<8x256xf32>
    %28 = arith.addf %21, %27 : vector<8x256xf32>
    %cst_17 = arith.constant 0.000000e+00 : f32
    %29 = vector.broadcast %cst_17 : f32 to vector<8x16xf32>
    %30 = vector.extract_strided_slice %8 {offsets = [0, 0], sizes = [8, 240], strides = [1, 1]} : vector<8x256xf32> to vector<8x240xf32>
    %31 = tpu.concatenate %29, %30 in 1 : vector<8x16xf32>, vector<8x240xf32> -> vector<8x256xf32>
    %c0_18 = arith.constant 0 : index
    %c1 = arith.constant 1 : index
    %32 = vector.load %arg4[%c0_18, %c1] : memref<8x9xf32, #tpu.memory_space<vmem>>, vector<8x1xf32>
    %33 = vector.broadcast %32 : vector<8x1xf32> to vector<8x256xf32>
    %34 = arith.mulf %31, %33 : vector<8x256xf32>
    %35 = arith.addf %28, %34 : vector<8x256xf32>
    %cst_19 = arith.constant 0.000000e+00 : f32
    %36 = vector.broadcast %cst_19 : f32 to vector<8x16xf32>
    %37 = vector.extract_strided_slice %20 {offsets = [0, 0], sizes = [8, 240], strides = [1, 1]} : vector<8x256xf32> to vector<8x240xf32>
    %38 = tpu.concatenate %36, %37 in 1 : vector<8x16xf32>, vector<8x240xf32> -> vector<8x256xf32>
    %c0_20 = arith.constant 0 : index
    %c2 = arith.constant 2 : index
    %39 = vector.load %arg4[%c0_20, %c2] : memref<8x9xf32, #tpu.memory_space<vmem>>, vector<8x1xf32>
    %40 = vector.broadcast %39 : vector<8x1xf32> to vector<8x256xf32>
    %41 = arith.mulf %38, %40 : vector<8x256xf32>
    %42 = arith.addf %35, %41 : vector<8x256xf32>
    %c0_21 = arith.constant 0 : index
    %c3 = arith.constant 3 : index
    %43 = vector.load %arg4[%c0_21, %c3] : memref<8x9xf32, #tpu.memory_space<vmem>>, vector<8x1xf32>
    %44 = vector.broadcast %43 : vector<8x1xf32> to vector<8x256xf32>
    %45 = arith.mulf %15, %44 : vector<8x256xf32>
    %46 = arith.addf %42, %45 : vector<8x256xf32>
    %c0_22 = arith.constant 0 : index
    %c4 = arith.constant 4 : index
    %47 = vector.load %arg4[%c0_22, %c4] : memref<8x9xf32, #tpu.memory_space<vmem>>, vector<8x1xf32>
    %48 = vector.broadcast %47 : vector<8x1xf32> to vector<8x256xf32>
    %49 = arith.mulf %8, %48 : vector<8x256xf32>
    %50 = arith.addf %46, %49 : vector<8x256xf32>
    %c0_23 = arith.constant 0 : index
    %c5 = arith.constant 5 : index
    %51 = vector.load %arg4[%c0_23, %c5] : memref<8x9xf32, #tpu.memory_space<vmem>>, vector<8x1xf32>
    %52 = vector.broadcast %51 : vector<8x1xf32> to vector<8x256xf32>
    %53 = arith.mulf %20, %52 : vector<8x256xf32>
    %54 = arith.addf %50, %53 : vector<8x256xf32>
    %cst_24 = arith.constant 0.000000e+00 : f32
    %55 = vector.broadcast %cst_24 : f32 to vector<8x16xf32>
    %56 = vector.extract_strided_slice %15 {offsets = [0, 16], sizes = [8, 240], strides = [1, 1]} : vector<8x256xf32> to vector<8x240xf32>
    %57 = tpu.concatenate %56, %55 in 1 : vector<8x240xf32>, vector<8x16xf32> -> vector<8x256xf32>
    %c0_25 = arith.constant 0 : index
    %c6 = arith.constant 6 : index
    %58 = vector.load %arg4[%c0_25, %c6] : memref<8x9xf32, #tpu.memory_space<vmem>>, vector<8x1xf32>
    %59 = vector.broadcast %58 : vector<8x1xf32> to vector<8x256xf32>
    %60 = arith.mulf %57, %59 : vector<8x256xf32>
    %61 = arith.addf %54, %60 : vector<8x256xf32>
    %cst_26 = arith.constant 0.000000e+00 : f32
    %62 = vector.broadcast %cst_26 : f32 to vector<8x16xf32>
    %63 = vector.extract_strided_slice %8 {offsets = [0, 16], sizes = [8, 240], strides = [1, 1]} : vector<8x256xf32> to vector<8x240xf32>
    %64 = tpu.concatenate %63, %62 in 1 : vector<8x240xf32>, vector<8x16xf32> -> vector<8x256xf32>
    %c0_27 = arith.constant 0 : index
    %c7 = arith.constant 7 : index
    %65 = vector.load %arg4[%c0_27, %c7] : memref<8x9xf32, #tpu.memory_space<vmem>>, vector<8x1xf32>
    %66 = vector.broadcast %65 : vector<8x1xf32> to vector<8x256xf32>
    %67 = arith.mulf %64, %66 : vector<8x256xf32>
    %68 = arith.addf %61, %67 : vector<8x256xf32>
    %cst_28 = arith.constant 0.000000e+00 : f32
    %69 = vector.broadcast %cst_28 : f32 to vector<8x16xf32>
    %70 = vector.extract_strided_slice %20 {offsets = [0, 16], sizes = [8, 240], strides = [1, 1]} : vector<8x256xf32> to vector<8x240xf32>
    %71 = tpu.concatenate %70, %69 in 1 : vector<8x240xf32>, vector<8x16xf32> -> vector<8x256xf32>
    %c0_29 = arith.constant 0 : index
    %c8 = arith.constant 8 : index
    %72 = vector.load %arg4[%c0_29, %c8] : memref<8x9xf32, #tpu.memory_space<vmem>>, vector<8x1xf32>
    %73 = vector.broadcast %72 : vector<8x1xf32> to vector<8x256xf32>
    %74 = arith.mulf %71, %73 : vector<8x256xf32>
    %75 = arith.addf %68, %74 : vector<8x256xf32>
    %c0_30 = arith.constant 0 : index
    %c0_31 = arith.constant 0 : index
    %76 = vector.load %arg5[%c0_30, %c0_31] : memref<8x1xf32, #tpu.memory_space<vmem>>, vector<8x1xf32>
    %77 = vector.broadcast %76 : vector<8x1xf32> to vector<8x256xf32>
    %78 = arith.addf %75, %77 : vector<8x256xf32>
    %cst_32 = arith.constant 0.000000e+00 : f32
    %79 = vector.broadcast %cst_32 : f32 to vector<8x256xf32>
    %80 = arith.maximumf %78, %79 : vector<8x256xf32>
    %c0_33 = arith.constant 0 : index
    %c0_34 = arith.constant 0 : index
    %81 = vector.load %arg6[%c0_33, %c0_34] : memref<32x8xf32, #tpu.memory_space<vmem>>, vector<32x8xf32>
    %cst_35 = arith.constant dense<0.000000e+00> : vector<32x256xf32>
    %82 = tpu.matmul %81, %80, %cst_35 {dimension_numbers = #tpu.dot_dimension_numbers<[1], [0], [0], [1], [0, 0, 1, 1], [], []>} : vector<32x8xf32>, vector<8x256xf32>, vector<32x256xf32> -> vector<32x256xf32>
    %c0_36 = arith.constant 0 : index
    %c0_37 = arith.constant 0 : index
    %83 = vector.load %arg7[%c0_36, %c0_37] : memref<32x1xf32, #tpu.memory_space<vmem>>, vector<32x1xf32>
    %84 = vector.broadcast %83 : vector<32x1xf32> to vector<32x256xf32>
    %85 = arith.addf %82, %84 : vector<32x256xf32>
    %86 = arith.addf %85, %1 : vector<32x256xf32>
    %cst_38 = arith.constant 0.000000e+00 : f32
    %87 = vector.broadcast %cst_38 : f32 to vector<32x256xf32>
    %88 = arith.maximumf %86, %87 : vector<32x256xf32>
    %c0_39 = arith.constant 0 : index
    %c0_40 = arith.constant 0 : index
    %c0_41 = arith.constant 0 : index
    %89 = vector.load %arg10[%c0_39, %c0_40, %c0_41] : memref<1x32x256xf32, #tpu.memory_space<vmem>>, vector<1x32x256xf32>
    %90 = vector.shape_cast %89 : vector<1x32x256xf32> to vector<32x256xf32>
    %91 = vector.shape_cast %88 : vector<32x256xf32> to vector<1x32x256xf32>
    tpu.vector_store %arg10[%c0_39, %c0_40, %c0_41], %91 {strides = array<i32>} : memref<1x32x256xf32, #tpu.memory_space<vmem>>, vector<1x32x256xf32>,
    return
  }
  func.func @transform_0(%arg0: i32) -> (i32, i32, i32) {
    %c0_i32 = arith.constant 0 : i32
    %c0_i32_0 = arith.constant 0 : i32
    %c0_i32_1 = arith.constant 0 : i32
    return %arg0, %c0_i32, %c0_i32_0 : i32, i32, i32
  }
  func.func @transform_1(%arg0: i32) -> (i32, i32) {
    %c0_i32 = arith.constant 0 : i32
    %c0_i32_0 = arith.constant 0 : i32
    %c0_i32_1 = arith.constant 0 : i32
    return %c0_i32, %c0_i32_0 : i32, i32
  }
  func.func @transform_2(%arg0: i32) -> (i32, i32) {
    %c0_i32 = arith.constant 0 : i32
    %c0_i32_0 = arith.constant 0 : i32
    %c0_i32_1 = arith.constant 0 : i32
    return %c0_i32, %c0_i32_0 : i32, i32
  }
  func.func @transform_3(%arg0: i32) -> (i32, i32) {
    %c0_i32 = arith.constant 0 : i32
    %c0_i32_0 = arith.constant 0 : i32
    %c0_i32_1 = arith.constant 0 : i32
    return %c0_i32, %c0_i32_0 : i32, i32
  }
  func.func @transform_4(%arg0: i32) -> (i32, i32) {
    %c0_i32 = arith.constant 0 : i32
    %c0_i32_0 = arith.constant 0 : i32
    %c0_i32_1 = arith.constant 0 : i32
    return %c0_i32, %c0_i32_0 : i32, i32
  }
  func.func @transform_5(%arg0: i32) -> (i32, i32) {
    %c0_i32 = arith.constant 0 : i32
    %c0_i32_0 = arith.constant 0 : i32
    %c0_i32_1 = arith.constant 0 : i32
    return %c0_i32, %c0_i32_0 : i32, i32
  }
  func.func @transform_6(%arg0: i32) -> (i32, i32) {
    %c0_i32 = arith.constant 0 : i32
    %c0_i32_0 = arith.constant 0 : i32
    %c0_i32_1 = arith.constant 0 : i32
    return %c0_i32, %c0_i32_0 : i32, i32
  }
  func.func @transform_7(%arg0: i32) -> (i32, i32) {
    %c0_i32 = arith.constant 0 : i32
    %c0_i32_0 = arith.constant 0 : i32
    %c0_i32_1 = arith.constant 0 : i32
    return %c0_i32, %c0_i32_0 : i32, i32
  }
  func.func @transform_8(%arg0: i32) -> (i32, i32) {
    %c0_i32 = arith.constant 0 : i32
    %c0_i32_0 = arith.constant 0 : i32
    %c0_i32_1 = arith.constant 0 : i32
    return %c0_i32, %c0_i32_0 : i32, i32
  }
  func.func @transform_9(%arg0: i32) -> (i32, i32, i32) {
    %c0_i32 = arith.constant 0 : i32
    %c0_i32_0 = arith.constant 0 : i32
    %c0_i32_1 = arith.constant 0 : i32
    return %arg0, %c0_i32, %c0_i32_0 : i32, i32, i32
  }
}

</mosaic_0001>

<llo_original>
// kernel: tpu_custom_call.1
$region0: #{tpu_custom_call.1}
  #allocation0 [shape = 'u32[]', space=smem, size = 0x4, offset = 0x4, fixed_abs, tag = 'smem constant byte address 0x4 - core index']
  #allocation1 [shape = 'u32[144,128]{1,0:T(1,128)}', space=vmem, size = 0x12000, scoped, tag = 'internal scratch']
  %s0 = inlined_call_operand.hbm [shape: f32[2,32,256], index: 0, kind: input, shape index: {}]
  %s1 = inlined_call_operand.vmem [shape: f32[8,32], index: 1, kind: input, shape index: {}]
  %s2 = inlined_call_operand.vmem [shape: f32[8,1], index: 2, kind: input, shape index: {}]
  %s3 = inlined_call_operand.vmem [shape: f32[8,9], index: 3, kind: input, shape index: {}]
  %s4 = inlined_call_operand.vmem [shape: f32[8,1], index: 4, kind: input, shape index: {}]
  %s5 = inlined_call_operand.vmem [shape: f32[32,8], index: 5, kind: input, shape index: {}]
  %s6 = inlined_call_operand.vmem [shape: f32[32,1], index: 6, kind: input, shape index: {}]
  %s7 = inlined_call_operand.vmem [shape: f32[1,256], index: 7, kind: input, shape index: {}]
  %s8 = inlined_call_operand.vmem [shape: f32[1,256], index: 8, kind: input, shape index: {}]
  %s9 = inlined_call_operand.hbm [shape: f32[2,32,256], index: 9, kind: output, shape index: {}]
  %s10 = sld [smem:[#allocation0]]
  $region73: #{tpu_custom_call.1} parent=0
    _
  %s12 = ssub.s32 1, %s10
  %s13 = scalar_select 0, %s12, %s10
  $region1: #{tpu_custom_call.1} parent=0
    #allocation2 [shape = 'u8[65536]{0}', space=vmem, size = 0x10000, scoped, tag = 'input window, operand 0']
    #allocation3 [shape = 's32[2]{0}', space=sflag, size = 0x8, scoped, tag = 'scoped memory for tpu_custom_call.1']
    #allocation4 [shape = 's32[2]{0}', space=sflag, size = 0x8, scoped, tag = 'scoped memory for tpu_custom_call.1']
    #allocation5 [shape = 'u8[65536]{0}', space=vmem, size = 0x10000, scoped, tag = 'output window, operand 0']
    %14 = vsyncpa [#allocation3], 0
    %s15 = scalar_lea.sflag [#allocation3], 1
    %16 = vsyncpa %s15, 0
    %17 = vsyncpa [#allocation4], 0
    %s18 = scalar_lea.sflag [#allocation4], 1
    %19 = vsyncpa %s18, 0
    loop: start=0, step=1, limit=4
    $region2: #{tpu_custom_call.1} parent=1 // loop_pre_header
      _
    $region3: #{tpu_custom_call.1} parent=1 // loop_header
      %s21 = sphi 0, %s25
      %p22 = scmp.ge.s32.totalorder %s21, 4
      %s31 = sphi 0, %s33
      %s34 = sphi 0, %s31
      %s35 = sphi 0, %s34
      %s51 = sphi 0, %s35
      %s55 = sphi 0, %s55
      %s57 = sphi 0, %s55
      %s58 = sphi 0, %s57
      %s72 = sphi 0, %s58
      %s76 = sphi 0, %s76
      %s78 = sphi 0, %s76
      %s79 = sphi 0, %s78
      %s93 = sphi 0, %s79
      %s97 = sphi 0, %s97
      %s99 = sphi 0, %s97
      %s100 = sphi 0, %s99
      %s114 = sphi 0, %s100
      %s118 = sphi 0, %s118
      %s120 = sphi 0, %s118
      %s121 = sphi 0, %s120
      %s135 = sphi 0, %s121
      %s139 = sphi 0, %s139
      %s141 = sphi 0, %s139
      %s142 = sphi 0, %s141
      %s156 = sphi 0, %s142
      %s160 = sphi 0, %s160
      %s162 = sphi 0, %s160
      %s163 = sphi 0, %s162
      %s177 = sphi 0, %s163
      %s181 = sphi 0, %s181
      %s183 = sphi 0, %s181
      %s184 = sphi 0, %s183
      %s198 = sphi 0, %s184
      %s202 = sphi 0, %s202
      %s204 = sphi 0, %s202
      %s205 = sphi 0, %s204
      %s219 = sphi 0, %s205
      %s225 = sphi 0, %s227
      %s228 = sphi 0, %s225
      %s229 = sphi 0, %s228
      %s245 = sphi 0, %s229
    $region4: #{tpu_custom_call.1} parent=1 // loop_header_branch
      %24 = sbr.rel (%p22) target = $region8
    $region5: #{tpu_custom_call.1} parent=1 // loop_body
      %s26 = ssub.s32 %s21, 1
      %s27 = ssub.s32 %s21, 2
      %s28 = sadd.s32 %s21, 1
      %s29 = ssub.s32 %s21, %s28
      %p30 = scmp.eq.s32.totalorder %s29, 0
      %s32 = sadd.s32 %s31, 1
      %s33 = scalar_select %p30, %s31, %s32
      %p36 = pneg %p30
      %p37 = scmp.eq.s32.totalorder %s21, 1
      %p38 = por %p36, %p37
      %p39 = scmp.ne.s32.totalorder %s31, %s34
      %p40 = scmp.eq.s32.totalorder %s21, 0
      %p41 = por %p39, %p40
      %p42 = scmp.ne.s32.totalorder %s31, %s34
      %p43 = scmp.eq.s32.totalorder %s26, 1
      %p44 = por %p42, %p43
      %p45 = scmp.ne.s32.totalorder %s34, %s35
      %p46 = scmp.eq.s32.totalorder %s26, 0
      %p47 = por %p45, %p46
      %p48 = scmp.ne.s32.totalorder %s34, %s35
      %p49 = scmp.eq.s32.totalorder %s27, 1
      %p50 = por %p48, %p49
      %p52 = scmp.ne.s32.totalorder %s35, %s51
      %p53 = scmp.eq.s32.totalorder %s27, 0
      %p54 = por %p52, %p53
      %s56 = sadd.s32 %s55, 1
      %p59 = scmp.eq.s32.totalorder %s21, 1
      %p60 = scmp.ne.s32.totalorder %s55, %s57
      %p61 = scmp.eq.s32.totalorder %s21, 0
      %p62 = por %p60, %p61
      %p63 = scmp.ne.s32.totalorder %s55, %s57
      %p64 = scmp.eq.s32.totalorder %s26, 1
      %p65 = por %p63, %p64
      %p66 = scmp.ne.s32.totalorder %s57, %s58
      %p67 = scmp.eq.s32.totalorder %s26, 0
      %p68 = por %p66, %p67
      %p69 = scmp.ne.s32.totalorder %s57, %s58
      %p70 = scmp.eq.s32.totalorder %s27, 1
      %p71 = por %p69, %p70
      %p73 = scmp.ne.s32.totalorder %s58, %s72
      %p74 = scmp.eq.s32.totalorder %s27, 0
      %p75 = por %p73, %p74
      %s77 = sadd.s32 %s76, 1
      %p80 = scmp.eq.s32.totalorder %s21, 1
      %p81 = scmp.ne.s32.totalorder %s76, %s78
      %p82 = scmp.eq.s32.totalorder %s21, 0
      %p83 = por %p81, %p82
      %p84 = scmp.ne.s32.totalorder %s76, %s78
      %p85 = scmp.eq.s32.totalorder %s26, 1
      %p86 = por %p84, %p85
      %p87 = scmp.ne.s32.totalorder %s78, %s79
      %p88 = scmp.eq.s32.totalorder %s26, 0
      %p89 = por %p87, %p88
      %p90 = scmp.ne.s32.totalorder %s78, %s79
      %p91 = scmp.eq.s32.totalorder %s27, 1
      %p92 = por %p90, %p91
      %p94 = scmp.ne.s32.totalorder %s79, %s93
      %p95 = scmp.eq.s32.totalorder %s27, 0
      %p96 = por %p94, %p95
      %s98 = sadd.s32 %s97, 1
      %p101 = scmp.eq.s32.totalorder %s21, 1
      %p102 = scmp.ne.s32.totalorder %s97, %s99
      %p103 = scmp.eq.s32.totalorder %s21, 0
      %p104 = por %p102, %p103
      %p105 = scmp.ne.s32.totalorder %s97, %s99
      %p106 = scmp.eq.s32.totalorder %s26, 1
      %p107 = por %p105, %p106
      %p108 = scmp.ne.s32.totalorder %s99, %s100
      %p109 = scmp.eq.s32.totalorder %s26, 0
      %p110 = por %p108, %p109
      %p111 = scmp.ne.s32.totalorder %s99, %s100
      %p112 = scmp.eq.s32.totalorder %s27, 1
      %p113 = por %p111, %p112
      %p115 = scmp.ne.s32.totalorder %s100, %s114
      %p116 = scmp.eq.s32.totalorder %s27, 0
      %p117 = por %p115, %p116
      %s119 = sadd.s32 %s118, 1
      %p122 = scmp.eq.s32.totalorder %s21, 1
      %p123 = scmp.ne.s32.totalorder %s118, %s120
      %p124 = scmp.eq.s32.totalorder %s21, 0
      %p125 = por %p123, %p124
      %p126 = scmp.ne.s32.totalorder %s118, %s120
      %p127 = scmp.eq.s32.totalorder %s26, 1
      %p128 = por %p126, %p127
      %p129 = scmp.ne.s32.totalorder %s120, %s121
      %p130 = scmp.eq.s32.totalorder %s26, 0
      %p131 = por %p129, %p130
      %p132 = scmp.ne.s32.totalorder %s120, %s121
      %p133 = scmp.eq.s32.totalorder %s27, 1
      %p134 = por %p132, %p133
      %p136 = scmp.ne.s32.totalorder %s121, %s135
      %p137 = scmp.eq.s32.totalorder %s27, 0
      %p138 = por %p136, %p137
      %s140 = sadd.s32 %s139, 1
      %p143 = scmp.eq.s32.totalorder %s21, 1
      %p144 = scmp.ne.s32.totalorder %s139, %s141
      %p145 = scmp.eq.s32.totalorder %s21, 0
      %p146 = por %p144, %p145
      %p147 = scmp.ne.s32.totalorder %s139, %s141
      %p148 = scmp.eq.s32.totalorder %s26, 1
      %p149 = por %p147, %p148
      %p150 = scmp.ne.s32.totalorder %s141, %s142
      %p151 = scmp.eq.s32.totalorder %s26, 0
      %p152 = por %p150, %p151
      %p153 = scmp.ne.s32.totalorder %s141, %s142
      %p154 = scmp.eq.s32.totalorder %s27, 1
      %p155 = por %p153, %p154
      %p157 = scmp.ne.s32.totalorder %s142, %s156
      %p158 = scmp.eq.s32.totalorder %s27, 0
      %p159 = por %p157, %p158
      %s161 = sadd.s32 %s160, 1
      %p164 = scmp.eq.s32.totalorder %s21, 1
      %p165 = scmp.ne.s32.totalorder %s160, %s162
      %p166 = scmp.eq.s32.totalorder %s21, 0
      %p167 = por %p165, %p166
      %p168 = scmp.ne.s32.totalorder %s160, %s162
      %p169 = scmp.eq.s32.totalorder %s26, 1
      %p170 = por %p168, %p169
      %p171 = scmp.ne.s32.totalorder %s162, %s163
      %p172 = scmp.eq.s32.totalorder %s26, 0
      %p173 = por %p171, %p172
      %p174 = scmp.ne.s32.totalorder %s162, %s163
      %p175 = scmp.eq.s32.totalorder %s27, 1
      %p176 = por %p174, %p175
      %p178 = scmp.ne.s32.totalorder %s163, %s177
      %p179 = scmp.eq.s32.totalorder %s27, 0
      %p180 = por %p178, %p179
      %s182 = sadd.s32 %s181, 1
      %p185 = scmp.eq.s32.totalorder %s21, 1
      %p186 = scmp.ne.s32.totalorder %s181, %s183
      %p187 = scmp.eq.s32.totalorder %s21, 0
      %p188 = por %p186, %p187
      %p189 = scmp.ne.s32.totalorder %s181, %s183
      %p190 = scmp.eq.s32.totalorder %s26, 1
      %p191 = por %p189, %p190
      %p192 = scmp.ne.s32.totalorder %s183, %s184
      %p193 = scmp.eq.s32.totalorder %s26, 0
      %p194 = por %p192, %p193
      %p195 = scmp.ne.s32.totalorder %s183, %s184
      %p196 = scmp.eq.s32.totalorder %s27, 1
      %p197 = por %p195, %p196
      %p199 = scmp.ne.s32.totalorder %s184, %s198
      %p200 = scmp.eq.s32.totalorder %s27, 0
      %p201 = por %p199, %p200
      %s203 = sadd.s32 %s202, 1
      %p206 = scmp.eq.s32.totalorder %s21, 1
      %p207 = scmp.ne.s32.totalorder %s202, %s204
      %p208 = scmp.eq.s32.totalorder %s21, 0
      %p209 = por %p207, %p208
      %p210 = scmp.ne.s32.totalorder %s202, %s204
      %p211 = scmp.eq.s32.totalorder %s26, 1
      %p212 = por %p210, %p211
      %p213 = scmp.ne.s32.totalorder %s204, %s205
      %p214 = scmp.eq.s32.totalorder %s26, 0
      %p215 = por %p213, %p214
      %p216 = scmp.ne.s32.totalorder %s204, %s205
      %p217 = scmp.eq.s32.totalorder %s27, 1
      %p218 = por %p216, %p217
      %p220 = scmp.ne.s32.totalorder %s205, %s219
      %p221 = scmp.eq.s32.totalorder %s27, 0
      %p222 = por %p220, %p221
      %s223 = ssub.s32 %s21, %s28
      %p224 = scmp.eq.s32.totalorder %s223, 0
      %s226 = sadd.s32 %s225, 1
      %s227 = scalar_select %p224, %s225, %s226
      %p230 = pneg %p224
      %p231 = scmp.eq.s32.totalorder %s21, 1
      %p232 = por %p230, %p231
      %p233 = scmp.ne.s32.totalorder %s225, %s228
      %p234 = scmp.eq.s32.totalorder %s21, 0
      %p235 = por %p233, %p234
      %p236 = scmp.ne.s32.totalorder %s225, %s228
      %p237 = scmp.eq.s32.totalorder %s26, 1
      %p238 = por %p236, %p237
      %p239 = scmp.ne.s32.totalorder %s228, %s229
      %p240 = scmp.eq.s32.totalorder %s26, 0
      %p241 = por %p239, %p240
      %p242 = scmp.ne.s32.totalorder %s228, %s229
      %p243 = scmp.eq.s32.totalorder %s27, 1
      %p244 = por %p242, %p243
      %p246 = scmp.ne.s32.totalorder %s229, %s245
      %p247 = scmp.eq.s32.totalorder %s27, 0
      %p248 = por %p246, %p247
      %p249 = scmp.le.s32.totalorder 1, %s21
      %p250 = scmp.lt.s32.totalorder %s21, 3
      %p251 = pnand %p249, %p250
      %p252 = pneg %p251
      // Predicated region
      $region9: #{tpu_custom_call.1} parent=5 // pred_check
        _
      $region10: #{tpu_custom_call.1} parent=5 // pred_check_branch
        %254 = sbr.rel (%p251) target = $region12
      $region11: #{tpu_custom_call.1} parent=5 // pred_region
        %s255 = ssub.s32 %s21, 1
        // Predicated region
        $region13: #{tpu_custom_call.1} parent=11 // pred_check
          %p256 = pneg %p68
        $region14: #{tpu_custom_call.1} parent=11 // pred_check_branch
          %258 = sbr.rel (%p256) target = $region16
        $region15: #{tpu_custom_call.1} parent=11 // pred_region
          _
        $region16: #{tpu_custom_call.1} parent=11 // pred_fallthru
          _
        // Predicated region
        $region17: #{tpu_custom_call.1} parent=11 // pred_check
          %p259 = pneg %p89
        $region18: #{tpu_custom_call.1} parent=11 // pred_check_branch
          %261 = sbr.rel (%p259) target = $region20
        $region19: #{tpu_custom_call.1} parent=11 // pred_region
          _
        $region20: #{tpu_custom_call.1} parent=11 // pred_fallthru
          _
        // Predicated region
        $region21: #{tpu_custom_call.1} parent=11 // pred_check
          %p262 = pneg %p110
        $region22: #{tpu_custom_call.1} parent=11 // pred_check_branch
          %264 = sbr.rel (%p262) target = $region24
        $region23: #{tpu_custom_call.1} parent=11 // pred_region
          _
        $region24: #{tpu_custom_call.1} parent=11 // pred_fallthru
          _
        // Predicated region
        $region25: #{tpu_custom_call.1} parent=11 // pred_check
          %p265 = pneg %p131
        $region26: #{tpu_custom_call.1} parent=11 // pred_check_branch
          %267 = sbr.rel (%p265) target = $region28
        $region27: #{tpu_custom_call.1} parent=11 // pred_region
          _
        $region28: #{tpu_custom_call.1} parent=11 // pred_fallthru
          _
        // Predicated region
        $region29: #{tpu_custom_call.1} parent=11 // pred_check
          %p268 = pneg %p152
        $region30: #{tpu_custom_call.1} parent=11 // pred_check_branch
          %270 = sbr.rel (%p268) target = $region32
        $region31: #{tpu_custom_call.1} parent=11 // pred_region
          _
        $region32: #{tpu_custom_call.1} parent=11 // pred_fallthru
          _
        // Predicated region
        $region33: #{tpu_custom_call.1} parent=11 // pred_check
          %p271 = pneg %p173
        $region34: #{tpu_custom_call.1} parent=11 // pred_check_branch
          %273 = sbr.rel (%p271) target = $region36
        $region35: #{tpu_custom_call.1} parent=11 // pred_region
          _
        $region36: #{tpu_custom_call.1} parent=11 // pred_fallthru
          _
        // Predicated region
        $region37: #{tpu_custom_call.1} parent=11 // pred_check
          %p274 = pneg %p194
        $region38: #{tpu_custom_call.1} parent=11 // pred_check_branch
          %276 = sbr.rel (%p274) target = $region40
        $region39: #{tpu_custom_call.1} parent=11 // pred_region
          _
        $region40: #{tpu_custom_call.1} parent=11 // pred_fallthru
          _
        // Predicated region
        $region41: #{tpu_custom_call.1} parent=11 // pred_check
          %p277 = pneg %p215
        $region42: #{tpu_custom_call.1} parent=11 // pred_check_branch
          %279 = sbr.rel (%p277) target = $region44
        $region43: #{tpu_custom_call.1} parent=11 // pred_region
          _
        $region44: #{tpu_custom_call.1} parent=11 // pred_fallthru
          _
      $region12: #{tpu_custom_call.1} parent=5 // pred_fallthru
        _
      %p280 = scmp.lt.s32.totalorder %s21, 2
      // Predicated region
      $region45: #{tpu_custom_call.1} parent=5 // pred_check
        %p281 = pneg %p280
      $region46: #{tpu_custom_call.1} parent=5 // pred_check_branch
        %283 = sbr.rel (%p281) target = $region48
      $region47: #{tpu_custom_call.1} parent=5 // pred_region
        // Predicated region
        $region49: #{tpu_custom_call.1} parent=47 // pred_check
          %p284 = pneg %p41
        $region50: #{tpu_custom_call.1} parent=47 // pred_check_branch
          %286 = sbr.rel (%p284) target = $region52
        $region51: #{tpu_custom_call.1} parent=47 // pred_region
          %s287 = sand.u32 %s31, 1
          %s288 = scalar_lea.sflag [#allocation3], %s287
          %s289 = sand.u32 %s31, 1
          %s290 = smul.addr %s289, 64
          %s291 = scalar_lea.vmem [#allocation2], %s290
          %s293 = ssub.s32 1024, 1024
          %294 = vsyncadd %s288, %s293
          %s295 = smul.addr %s21, 8
          %s296 = smul.addr %s295, 128
          %s297 = scalar_lea.hbm %s0, %s296
          %s298 = sshll.u32 %s291, 4
          %s299 = int_to_ptr.vmem [resolvable:$true] %s298
          %304 = dma.hbm_to_vmem [thread:$0]  %s297, 1024, %s299, %s288, 256, 256, 16
        $region52: #{tpu_custom_call.1} parent=47 // pred_fallthru
          _
      $region48: #{tpu_custom_call.1} parent=5 // pred_fallthru
        _
      %p305 = scmp.le.s32.totalorder 1, %s21
      %p306 = scmp.lt.s32.totalorder %s21, 3
      %p307 = pnand %p305, %p306
      %p308 = pneg %p307
      // Predicated region
      $region53: #{tpu_custom_call.1} parent=5 // pred_check
        _
      $region54: #{tpu_custom_call.1} parent=5 // pred_check_branch
        %310 = sbr.rel (%p307) target = $region56
      $region55: #{tpu_custom_call.1} parent=5 // pred_region
        %s311 = ssub.s32 %s21, 1
        %s312 = sand.u32 %s34, 1
        %s313 = scalar_lea.sflag [#allocation3], %s312
        %s314 = sand.u32 %s34, 1
        %s315 = smul.addr %s314, 64
        %s316 = scalar_lea.vmem [#allocation2], %s315
        // Predicated region
        $region57: #{tpu_custom_call.1} parent=55 // pred_check
          %p317 = pneg %p47
        $region58: #{tpu_custom_call.1} parent=55 // pred_check_branch
          %319 = sbr.rel (%p317) target = $region60
        $region59: #{tpu_custom_call.1} parent=55 // pred_region
          %320 = dma.done %s313, 1024
        $region60: #{tpu_custom_call.1} parent=55 // pred_fallthru
          _
        %s321 = sand.u32 %s34, 1
        %s322 = scalar_lea.sflag [#allocation3], %s321
        %s323 = sand.u32 %s34, 1
        %s324 = smul.addr %s323, 64
        %s325 = scalar_lea.vmem [#allocation2], %s324
        %p326 = pneg %p47
        %p327 = pneg %p44
        %p328 = pneg %p68
        %p329 = pneg %p65
        %p330 = pneg %p89
        %p331 = pneg %p86
        %p332 = pneg %p110
        %p333 = pneg %p107
        %p334 = pneg %p131
        %p335 = pneg %p128
        %p336 = pneg %p152
        %p337 = pneg %p149
        %p338 = pneg %p173
        %p339 = pneg %p170
        %p340 = pneg %p194
        %p341 = pneg %p191
        %p342 = pneg %p215
        %p343 = pneg %p212
        %p344 = pneg %p241
        %p345 = pneg %p238
        %s346 = sand.u32 %s228, 1
        %s347 = scalar_lea.sflag [#allocation4], %s346
        %s348 = sand.u32 %s228, 1
        %s349 = smul.addr %s348, 64
        %s350 = scalar_lea.vmem [#allocation5], %s349
        %v351 = vld [vmem:[%s316] sm:$0xff]
        %v352 = vld [vmem:[%s316 + $0x8] sm:$0xff]
        %v353 = vld [vmem:[%s316 + $0x10] sm:$0xff]
        %v354 = vld [vmem:[%s316 + $0x18] sm:$0xff]
        %v355 = vld [vmem:[%s316 + $0x20] sm:$0xff]
        %v356 = vld [vmem:[%s316 + $0x28] sm:$0xff]
        %v357 = vld [vmem:[%s316 + $0x30] sm:$0xff]
        %v358 = vld [vmem:[%s316 + $0x38] sm:$0xff]
        %v359 = vld [vmem:[%s1] sm:$0xff]
        %v360 = vld [vmem:[%s2] sm:$0xff]
        %362 = vset.pattern.permute.xlu0 0
        %363 = vperm.xlu0 %362, %v360
        %v364 = vpop.permute.xlu0 %363
        %vm366 = vcmask 261120
        %v368 = vsel %vm366, %v359, 0
        %370 = vmatprep.subr.mxu0 %v352
        %371 = vmatpush1.msra.mxu0 %v351
        %372 = vmatprep.subr.mxu0 %v354
        %373 = vmatpush1.msra.mxu0 %v353
        %374 = vmatprep.subr.mxu0 %v356
        %375 = vmatpush1.msra.mxu0 %v355
        %376 = vmatprep.subr.mxu0 %v358
        %377 = vmatpush1.msra.mxu0 %v357
        %378 = vmatprep.subr.mxu0 0.0
        %379 = vmatpush1.msra.mxu0 0.0
        %380 = vmatprep.subr.mxu0 0.0
        %381 = vmatpush1.msra.mxu0 0.0
        %382 = vmatprep.subr.mxu0 0.0
        %383 = vmatpush1.msra.mxu0 0.0
        %384 = vmatprep.subr.mxu0 0.0
        %385 = vmatpush1.msra.mxu0 0.0
        %386 = vmatprep.subr.mxu0 0.0
        %387 = vmatpush1.msra.mxu0 0.0
        %388 = vmatprep.subr.mxu0 0.0
        %389 = vmatpush1.msra.mxu0 0.0
        %390 = vmatprep.subr.mxu0 0.0
        %391 = vmatpush1.msra.mxu0 0.0
        %392 = vmatprep.subr.mxu0 0.0
        %393 = vmatpush1.msra.mxu0 0.0
        %394 = vmatprep.subr.mxu0 0.0
        %395 = vmatpush1.msra.mxu0 0.0
        %396 = vmatprep.subr.mxu0 0.0
        %397 = vmatpush1.msra.mxu0 0.0
        %398 = vmatprep.subr.mxu0 0.0
        %399 = vmatpush1.msra.mxu0 0.0
        %400 = vmatprep.subr.mxu0 0.0
        %401 = vmatpush1.msra.mxu0 0.0
        %402 = vmatprep.subr.mxu0 0.0
        %403 = vmatpush1.msra.mxu0 0.0
        %404 = vmatprep.subr.mxu0 0.0
        %405 = vmatpush1.msra.mxu0 0.0
        %406 = vmatprep.subr.mxu0 0.0
        %407 = vmatpush1.msra.mxu0 0.0
        %408 = vmatprep.subr.mxu0 0.0
        %409 = vmatpush1.msra.mxu0 0.0
        %410 = vmatprep.subr.mxu0 0.0
        %411 = vmatpush1.msra.mxu0 0.0
        %412 = vmatprep.subr.mxu0 0.0
        %413 = vmatpush1.msra.mxu0 0.0
        %414 = vmatprep.subr.mxu0 0.0
        %415 = vmatpush1.msra.mxu0 0.0
        %416 = vmatprep.subr.mxu0 0.0
        %417 = vmatpush1.msra.mxu0 0.0
        %418 = vmatprep.subr.mxu0 0.0
        %419 = vmatpush1.msra.mxu0 0.0
        %420 = vmatprep.subr.mxu0 0.0
        %421 = vmatpush1.msra.mxu0 0.0
        %422 = vmatprep.subr.mxu0 0.0
        %423 = vmatpush1.msra.mxu0 0.0
        %424 = vmatprep.subr.mxu0 0.0
        %425 = vmatpush1.msra.mxu0 0.0
        %426 = vmatprep.subr.mxu0 0.0
        %427 = vmatpush1.msra.mxu0 0.0
        %428 = vmatprep.subr.mxu0 0.0
        %429 = vmatpush1.msra.mxu0 0.0
        %430 = vmatprep.subr.mxu0 0.0
        %431 = vmatpush1.msra.mxu0 0.0
        %432 = vmatprep.subr.mxu0 0.0
        %433 = vmatpush1.msra.mxu0 0.0
        %434 = vmatprep.mubr.f32.mxu0 0.0
        %435 = vmatmul.mubr.f32.gmra.mrb[0].mxu0 %v368
        %v436 = vpop.f32.mrb[0].mxu0
        %v437 = vadd.f32 %v364, %v436
        %v438 = vpop.f32.mrb[0].mxu0
        %v439 = vadd.f32 %v364, %v438
        %440 = vdwg.mxu0
        %v441 = vmax.f32 %v437, 0.0
        %v442 = vmax.f32 %v439, 0.0
        %v443 = vld [vmem:[%s7] sm:$0x3]
        %v444 = vld [vmem:[%s8] sm:$0x3]
        %447 = vrot.lane.b32.xlu0 %v441, 1
        %v448 = vpop.permute.xlu0 %447
        %449 = vrot.lane.b32.xlu0 %v442, 1
        %v450 = vpop.permute.xlu0 %449
        %vm451 = vcmask 7168
        %v452 = vsel %vm451, %v448, %v450
        %v455 = vsel %vm451, 0.0, %v448
        %v457 = vlaneseq
        %v458 = vshrl.u32 %v457, 7
        %v459 = vsub.s32 0, %v458
        %v460 = vrot.slane %v443, %v459
        %v461 = vlaneseq
        %v462 = vshrl.u32 %v461, 7
        %v463 = vsub.s32 1, %v462
        %v464 = vrot.slane %v443, %v463
        %v467 = vmul.f32 %v455, %v460
        %v468 = vmul.f32 %v452, %v464
        %469 = vrot.lane.b32.xlu0 %v441, 127
        %v470 = vpop.permute.xlu0 %469
        %471 = vrot.lane.b32.xlu0 %v442, 127
        %v472 = vpop.permute.xlu0 %471
        %vm473 = vcmask 1039360
        %v474 = vsel %vm473, %v470, %v472
        %v477 = vsel %vm473, %v472, 0.0
        %v479 = vlaneseq
        %v480 = vshrl.u32 %v479, 7
        %v481 = vsub.s32 0, %v480
        %v482 = vrot.slane %v444, %v481
        %v483 = vlaneseq
        %v484 = vshrl.u32 %v483, 7
        %v485 = vsub.s32 1, %v484
        %v486 = vrot.slane %v444, %v485
        %v489 = vmul.f32 %v474, %v482
        %v490 = vmul.f32 %v477, %v486
        %493 = vrot.lane.b32.xlu0 %v467, 16
        %v494 = vpop.permute.xlu0 %493
        %495 = vrot.lane.b32.xlu0 %v468, 16
        %v496 = vpop.permute.xlu0 %495
        %vm497 = vcmask 130048
        %v498 = vsel %vm497, %v494, %v496
        %v501 = vsel %vm497, 0.0, %v494
        %v502 = vld [vmem:[%s3] sm:$0xff]
        %504 = vset.pattern.permute.xlu0 0
        %505 = vperm.xlu0 %504, %v502
        %v506 = vpop.permute.xlu0 %505
        %v508 = vmul.f32 %v501, %v506
        %v509 = vmul.f32 %v498, %v506
        %v510 = vadd.f32 %v508, 0.0
        %v511 = vadd.f32 %v509, 0.0
        %512 = vrot.lane.b32.xlu0 %v441, 16
        %v513 = vpop.permute.xlu0 %512
        %514 = vrot.lane.b32.xlu0 %v442, 16
        %v515 = vpop.permute.xlu0 %514
        %v516 = vsel %vm497, %v513, %v515
        %v519 = vsel %vm497, 0.0, %v513
        %520 = vset.pattern.permute.xlu0 1
        %521 = vperm.xlu0 %520, %v502
        %v522 = vpop.permute.xlu0 %521
        %v524 = vmul.f32 %v519, %v522
        %v525 = vmul.f32 %v516, %v522
        %v526 = vadd.f32 %v510, %v524
        %v527 = vadd.f32 %v511, %v525
        %530 = vrot.lane.b32.xlu0 %v489, 16
        %v531 = vpop.permute.xlu0 %530
        %532 = vrot.lane.b32.xlu0 %v490, 16
        %v533 = vpop.permute.xlu0 %532
        %v534 = vsel %vm497, %v531, %v533
        %v537 = vsel %vm497, 0.0, %v531
        %538 = vset.pattern.permute.xlu0 2
        %539 = vperm.xlu0 %538, %v502
        %v540 = vpop.permute.xlu0 %539
        %v542 = vmul.f32 %v537, %v540
        %v543 = vmul.f32 %v534, %v540
        %v544 = vadd.f32 %v526, %v542
        %v545 = vadd.f32 %v527, %v543
        %546 = vset.pattern.permute.xlu0 3
        %547 = vperm.xlu0 %546, %v502
        %v548 = vpop.permute.xlu0 %547
        %v550 = vmul.f32 %v467, %v548
        %v551 = vmul.f32 %v468, %v548
        %v552 = vadd.f32 %v544, %v550
        %v553 = vadd.f32 %v545, %v551
        %554 = vset.pattern.permute.xlu0 4
        %555 = vperm.xlu0 %554, %v502
        %v556 = vpop.permute.xlu0 %555
        %v558 = vmul.f32 %v441, %v556
        %v559 = vmul.f32 %v442, %v556
        %v560 = vadd.f32 %v552, %v558
        %v561 = vadd.f32 %v553, %v559
        %562 = vset.pattern.permute.xlu0 5
        %563 = vperm.xlu0 %562, %v502
        %v564 = vpop.permute.xlu0 %563
        %v566 = vmul.f32 %v489, %v564
        %v567 = vmul.f32 %v490, %v564
        %v568 = vadd.f32 %v560, %v566
        %v569 = vadd.f32 %v561, %v567
        %570 = vrot.lane.b32.xlu0 %v467, 112
        %v571 = vpop.permute.xlu0 %570
        %572 = vrot.lane.b32.xlu0 %v468, 112
        %v573 = vpop.permute.xlu0 %572
        %vm574 = vcmask 916480
        %v575 = vsel %vm574, %v571, %v573
        %v578 = vsel %vm574, %v573, 0.0
        %579 = vset.pattern.permute.xlu0 6
        %580 = vperm.xlu0 %579, %v502
        %v581 = vpop.permute.xlu0 %580
        %v583 = vmul.f32 %v575, %v581
        %v584 = vmul.f32 %v578, %v581
        %v585 = vadd.f32 %v568, %v583
        %v586 = vadd.f32 %v569, %v584
        %587 = vrot.lane.b32.xlu0 %v441, 112
        %v588 = vpop.permute.xlu0 %587
        %589 = vrot.lane.b32.xlu0 %v442, 112
        %v590 = vpop.permute.xlu0 %589
        %v591 = vsel %vm574, %v588, %v590
        %v594 = vsel %vm574, %v590, 0.0
        %595 = vset.pattern.permute.xlu0 7
        %596 = vperm.xlu0 %595, %v502
        %v597 = vpop.permute.xlu0 %596
        %v599 = vmul.f32 %v591, %v597
        %v600 = vmul.f32 %v594, %v597
        %v601 = vadd.f32 %v585, %v599
        %v602 = vadd.f32 %v586, %v600
        %603 = vrot.lane.b32.xlu0 %v489, 112
        %v604 = vpop.permute.xlu0 %603
        %605 = vrot.lane.b32.xlu0 %v490, 112
        %v606 = vpop.permute.xlu0 %605
        %v607 = vsel %vm574, %v604, %v606
        %v610 = vsel %vm574, %v606, 0.0
        %611 = vset.pattern.permute.xlu0 8
        %612 = vperm.xlu0 %611, %v502
        %v613 = vpop.permute.xlu0 %612
        %v615 = vmul.f32 %v607, %v613
        %v616 = vmul.f32 %v610, %v613
        %v617 = vadd.f32 %v601, %v615
        %v618 = vadd.f32 %v602, %v616
        %v619 = vld [vmem:[%s4] sm:$0xff]
        %621 = vset.pattern.permute.xlu0 0
        %622 = vperm.xlu0 %621, %v619
        %v623 = vpop.permute.xlu0 %622
        %v625 = vadd.f32 %v617, %v623
        %v626 = vadd.f32 %v618, %v623
        %v627 = vmax.f32 %v625, 0.0
        %v628 = vmax.f32 %v626, 0.0
        %v629 = vld [vmem:[%s5] sm:$0xff]
        %v630 = vld [vmem:[%s5 + $0x8] sm:$0xff]
        %v631 = vld [vmem:[%s5 + $0x10] sm:$0xff]
        %v632 = vld [vmem:[%s5 + $0x18] sm:$0xff]
        %v633 = vld [vmem:[%s6] sm:$0xff]
        %v634 = vld [vmem:[%s6 + $0x8] sm:$0xff]
        %v635 = vld [vmem:[%s6 + $0x10] sm:$0xff]
        %v636 = vld [vmem:[%s6 + $0x18] sm:$0xff]
        %638 = vset.pattern.permute.xlu0 0
        %639 = vperm.xlu0 %638, %v633
        %v640 = vpop.permute.xlu0 %639
        %643 = vset.pattern.permute.xlu0 0
        %644 = vperm.xlu0 %643, %v634
        %v645 = vpop.permute.xlu0 %644
        %648 = vset.pattern.permute.xlu0 0
        %649 = vperm.xlu0 %648, %v635
        %v650 = vpop.permute.xlu0 %649
        %653 = vset.pattern.permute.xlu0 0
        %654 = vperm.xlu0 %653, %v636
        %v655 = vpop.permute.xlu0 %654
        %vm657 = vcmask 64512
        %v659 = vsel %vm657, %v629, 0
        %v662 = vsel %vm657, %v630, 0
        %v665 = vsel %vm657, %v631, 0
        %v668 = vsel %vm657, %v632, 0
        %670 = vmatprep.subr.mxu0 %v628
        %671 = vmatpush1.msra.mxu0 %v627
        %672 = vmatprep.subr.mxu0 0.0
        %673 = vmatpush1.msra.mxu0 0.0
        %674 = vmatprep.subr.mxu0 0.0
        %675 = vmatpush1.msra.mxu0 0.0
        %676 = vmatprep.subr.mxu0 0.0
        %677 = vmatpush1.msra.mxu0 0.0
        %678 = vmatprep.subr.mxu0 0.0
        %679 = vmatpush1.msra.mxu0 0.0
        %680 = vmatprep.subr.mxu0 0.0
        %681 = vmatpush1.msra.mxu0 0.0
        %682 = vmatprep.subr.mxu0 0.0
        %683 = vmatpush1.msra.mxu0 0.0
        %684 = vmatprep.subr.mxu0 0.0
        %685 = vmatpush1.msra.mxu0 0.0
        %686 = vmatprep.subr.mxu0 0.0
        %687 = vmatpush1.msra.mxu0 0.0
        %688 = vmatprep.subr.mxu0 0.0
        %689 = vmatpush1.msra.mxu0 0.0
        %690 = vmatprep.subr.mxu0 0.0
        %691 = vmatpush1.msra.mxu0 0.0
        %692 = vmatprep.subr.mxu0 0.0
        %693 = vmatpush1.msra.mxu0 0.0
        %694 = vmatprep.subr.mxu0 0.0
        %695 = vmatpush1.msra.mxu0 0.0
        %696 = vmatprep.subr.mxu0 0.0
        %697 = vmatpush1.msra.mxu0 0.0
        %698 = vmatprep.subr.mxu0 0.0
        %699 = vmatpush1.msra.mxu0 0.0
        %700 = vmatprep.subr.mxu0 0.0
        %701 = vmatpush1.msra.mxu0 0.0
        %702 = vmatprep.subr.mxu0 0.0
        %703 = vmatpush1.msra.mxu0 0.0
        %704 = vmatprep.subr.mxu0 0.0
        %705 = vmatpush1.msra.mxu0 0.0
        %706 = vmatprep.subr.mxu0 0.0
        %707 = vmatpush1.msra.mxu0 0.0
        %708 = vmatprep.subr.mxu0 0.0
        %709 = vmatpush1.msra.mxu0 0.0
        %710 = vmatprep.subr.mxu0 0.0
        %711 = vmatpush1.msra.mxu0 0.0
        %712 = vmatprep.subr.mxu0 0.0
        %713 = vmatpush1.msra.mxu0 0.0
        %714 = vmatprep.subr.mxu0 0.0
        %715 = vmatpush1.msra.mxu0 0.0
        %716 = vmatprep.subr.mxu0 0.0
        %717 = vmatpush1.msra.mxu0 0.0
        %718 = vmatprep.subr.mxu0 0.0
        %719 = vmatpush1.msra.mxu0 0.0
        %720 = vmatprep.subr.mxu0 0.0
        %721 = vmatpush1.msra.mxu0 0.0
        %722 = vmatprep.subr.mxu0 0.0
        %723 = vmatpush1.msra.mxu0 0.0
        %724 = vmatprep.subr.mxu0 0.0
        %725 = vmatpush1.msra.mxu0 0.0
        %726 = vmatprep.subr.mxu0 0.0
        %727 = vmatpush1.msra.mxu0 0.0
        %728 = vmatprep.subr.mxu0 0.0
        %729 = vmatpush1.msra.mxu0 0.0
        %730 = vmatprep.subr.mxu0 0.0
        %731 = vmatpush1.msra.mxu0 0.0
        %732 = vmatprep.subr.mxu0 0.0
        %733 = vmatpush1.msra.mxu0 0.0
        %734 = vmatprep.mubr.f32.mxu0 0.0
        %735 = vmatmul.mubr.f32.gmra.mrb[0].mxu0 %v659
        %v736 = vpop.f32.mrb[0].mxu0
        %v737 = vadd.f32 %v640, %v736
        %v738 = vpop.f32.mrb[0].mxu0
        %v739 = vadd.f32 %v640, %v738
        %740 = vmatprep.mubr.f32.mxu0 0.0
        %741 = vmatmul.mubr.f32.gmra.mrb[0].mxu0 %v662
        %v742 = vpop.f32.mrb[0].mxu0
        %v743 = vadd.f32 %v645, %v742
        %v744 = vpop.f32.mrb[0].mxu0
        %v745 = vadd.f32 %v645, %v744
        %746 = vmatprep.mubr.f32.mxu0 0.0
        %747 = vmatmul.mubr.f32.gmra.mrb[0].mxu0 %v665
        %v748 = vpop.f32.mrb[0].mxu0
        %v749 = vadd.f32 %v650, %v748
        %v750 = vpop.f32.mrb[0].mxu0
        %v751 = vadd.f32 %v650, %v750
        %752 = vmatprep.mubr.f32.mxu0 0.0
        %753 = vmatmul.mubr.f32.gmra.mrb[0].mxu0 %v668
        %v754 = vpop.f32.mrb[0].mxu0
        %v755 = vadd.f32 %v655, %v754
        %v756 = vpop.f32.mrb[0].mxu0
        %v757 = vadd.f32 %v655, %v756
        %758 = vdwg.mxu0
        %v759 = vadd.f32 %v737, %v351
        %v760 = vadd.f32 %v739, %v352
        %v761 = vadd.f32 %v743, %v353
        %v762 = vadd.f32 %v745, %v354
        %v763 = vadd.f32 %v749, %v355
        %v764 = vadd.f32 %v751, %v356
        %v765 = vadd.f32 %v755, %v357
        %v766 = vadd.f32 %v757, %v358
        %v767 = vmax.f32 %v759, 0.0
        %v768 = vmax.f32 %v760, 0.0
        %v769 = vmax.f32 %v761, 0.0
        %v770 = vmax.f32 %v762, 0.0
        %v771 = vmax.f32 %v763, 0.0
        %v772 = vmax.f32 %v764, 0.0
        %v773 = vmax.f32 %v765, 0.0
        %v774 = vmax.f32 %v766, 0.0
        %775 = vst [vmem:[%s350] sm:$0xff] %v767
        %776 = vst [vmem:[%s350 + $0x8] sm:$0xff] %v768
        %777 = vst [vmem:[%s350 + $0x10] sm:$0xff] %v769
        %778 = vst [vmem:[%s350 + $0x18] sm:$0xff] %v770
        %779 = vst [vmem:[%s350 + $0x20] sm:$0xff] %v771
        %780 = vst [vmem:[%s350 + $0x28] sm:$0xff] %v772
        %781 = vst [vmem:[%s350 + $0x30] sm:$0xff] %v773
        %782 = vst [vmem:[%s350 + $0x38] sm:$0xff] %v774
        %s783 = sand.u32 %s228, 1
        %s784 = scalar_lea.sflag [#allocation4], %s783
        %s785 = sand.u32 %s228, 1
        %s786 = smul.addr %s785, 64
        %s787 = scalar_lea.vmem [#allocation5], %s786
        // Predicated region
        $region61: #{tpu_custom_call.1} parent=55 // pred_check
          %p788 = pneg %p238
        $region62: #{tpu_custom_call.1} parent=55 // pred_check_branch
          %790 = sbr.rel (%p788) target = $region64
        $region63: #{tpu_custom_call.1} parent=55 // pred_region
          %s792 = ssub.s32 1024, 1024
          %793 = vsyncadd %s784, %s792
          %s794 = smul.addr %s26, 8
          %s795 = smul.addr %s794, 128
          %s796 = scalar_lea.hbm %s9, %s795
          %s797 = sshll.u32 %s787, 4
          %s798 = int_to_ptr.vmem [resolvable:$true] %s797
          %803 = dma.vmem_to_hbm [thread:$0]  %s798, 1024, %s796, %s784, 256, 256, 16
        $region64: #{tpu_custom_call.1} parent=55 // pred_fallthru
          _
      $region56: #{tpu_custom_call.1} parent=5 // pred_fallthru
        _
      %p804 = scmp.le.s32.totalorder 2, %s21
      // Predicated region
      $region65: #{tpu_custom_call.1} parent=5 // pred_check
        %p805 = pneg %p804
      $region66: #{tpu_custom_call.1} parent=5 // pred_check_branch
        %807 = sbr.rel (%p805) target = $region68
      $region67: #{tpu_custom_call.1} parent=5 // pred_region
        %s808 = ssub.s32 %s21, 2
        // Predicated region
        $region69: #{tpu_custom_call.1} parent=67 // pred_check
          %p809 = pneg %p244
        $region70: #{tpu_custom_call.1} parent=67 // pred_check_branch
          %811 = sbr.rel (%p809) target = $region72
        $region71: #{tpu_custom_call.1} parent=67 // pred_region
          %s812 = sand.u32 %s229, 1
          %s813 = scalar_lea.sflag [#allocation4], %s812
          %s814 = sand.u32 %s229, 1
          %s815 = smul.addr %s814, 64
          %s816 = scalar_lea.vmem [#allocation5], %s815
          %817 = dma.done %s813, 1024
        $region72: #{tpu_custom_call.1} parent=67 // pred_fallthru
          _
      $region68: #{tpu_custom_call.1} parent=5 // pred_fallthru
        _
    $region6: #{tpu_custom_call.1} parent=1 // loop_footer
      %s25 = sadd.s32 1, %s21
    $region7: #{tpu_custom_call.1} parent=1 // loop_footer_branch
      %20 = sbr.rel target = $region3
    $region8: #{tpu_custom_call.1} parent=1 // loop_exit
      _
    %818 = vsyncpa [#allocation3], 1
    %s819 = scalar_lea.sflag [#allocation3], 1
    %820 = vsyncpa %s819, 1
    %821 = vsyncpa [#allocation4], 1
    %s822 = scalar_lea.sflag [#allocation4], 1
    %823 = vsyncpa %s822, 1

</llo_original>
